<compile_context>
chip_gen: v6e
topology: v6e:2x2x1
jax: 0.10.0
libtpu: 0.0.40
codegen_flags: <defaults>
</compile_context>

<pallas_src>
import jax
import jax.numpy as jnp
import numpy as np
from jax import lax
from jax.experimental import pallas as pl
from jax.experimental.pallas import tpu as pltpu


def _vmem_capacity_bytes():
    try:
        return int(pltpu.get_tpu_info().vmem_capacity_bytes)
    except Exception:
        return 64 * 1024 * 1024        # conservative (v7x physical)


# ----------------------------------------------------------------------------
# Fused single-pass kernel: gram + stats + affine glue + apply, all in VMEM
# ----------------------------------------------------------------------------
def _make_fused_kernel(C, HW, eps, gram_norm):
    n = float(HW)
    nc = float(C * HW)
    inv_gram_norm = 1.0 / float(gram_norm)

    def kernel(x_ref, weff_ref, pc_ref, o_ref):
        # x resident in VMEM: one HBM read, one HBM write for the whole op.
        x = x_ref[...].astype(jnp.float32)                        # (C, HW)

        # MXU: unscaled gram  G = X X^T  with f32 accumulation.
        gram = lax.dot_general(x, x, (((1,), (1,)), ((), ())),
                               preferred_element_type=jnp.float32)  # (C, C)

        # Per-channel sum; sum-of-squares recovered from diag(G) (f32 acc).
        csum = jnp.sum(x, axis=1, keepdims=True)                   # (C, 1)
        ii = lax.broadcasted_iota(jnp.int32, (C, C), 0)
        jj = lax.broadcasted_iota(jnp.int32, (C, C), 1)
        sumsq = jnp.sum(jnp.where(ii == jj, gram, 0.0), axis=1,
                        keepdims=True)                             # (C, 1)

        # newweight = vec(G / norm) . (W1 @ label)   -> (1, 1)
        nw = jnp.sum(gram * weff_ref[...], keepdims=True) * inv_gram_norm

        g1 = pc_ref[:, 0:1]
        g2 = pc_ref[:, 1:2]
        b1 = pc_ref[:, 2:3]
        b2 = pc_ref[:, 3:4]
        rho = pc_ref[:, 4:5]
        gamma = g1 * nw + g2                                       # (C, 1)
        beta = b1 * nw + b2

        # Instance-norm stats (torch.var is unbiased -> divide by N-1).
        in_mean = csum * (1.0 / n)
        in_var = jnp.maximum((sumsq - n * in_mean * in_mean) / (n - 1.0), 0.0)
        inv_in = lax.rsqrt(in_var + eps)

        # Layer-norm stats.
        ln_mean = jnp.sum(csum, keepdims=True) * (1.0 / nc)        # (1, 1)
        ln_var = jnp.maximum(
            (jnp.sum(sumsq, keepdims=True) - nc * ln_mean * ln_mean)
            / (nc - 1.0), 0.0)
        inv_ln = lax.rsqrt(ln_var + eps)

        # Fused per-channel affine  o = x*A + B  (pure VPU FMA on lane-dense x)
        a = gamma * (rho * inv_in + (1.0 - rho) * inv_ln)          # (C, 1)
        b = beta - gamma * (rho * in_mean * inv_in +
                            (1.0 - rho) * ln_mean * inv_ln)        # (C, 1)
        o_ref[...] = (x * a + b).astype(o_ref.dtype)

    return kernel


# ----------------------------------------------------------------------------
# Two-pass fallback (feature maps too large to keep resident in VMEM)
# ----------------------------------------------------------------------------
def _stats_kernel(x_ref, gram_ref, csum_ref):
    @pl.when(pl.program_id(0) == 0)
    def _():
        gram_ref[...] = jnp.zeros_like(gram_ref)
        csum_ref[...] = jnp.zeros_like(csum_ref)

    x = x_ref[...].astype(jnp.float32)                             # (C, TILE)
    gram_ref[...] += lax.dot_general(x, x, (((1,), (1,)), ((), ())),
                                     preferred_element_type=jnp.float32)
    csum_ref[...] += jnp.sum(x, axis=1, keepdims=True)             # (C, 1)


def _apply_kernel(x_ref, ab_ref, o_ref):
    a = ab_ref[:, 0:1]                                             # (C, 1)
    b = ab_ref[:, 1:2]                                             # (C, 1)
    o_ref[...] = (x_ref[...].astype(jnp.float32) * a + b).astype(o_ref.dtype)


def _pick_tile(C, hw, itemsize, vmem_budget):
    """Largest lane-aligned tile within the pipelining VMEM budget.

    A single full-HW block (block == full array) is allowed and preferred
    when it fits — a forced multi-step grid buys nothing for small maps."""
    per_elem = max(itemsize, 4)
    if 4 * C * hw * per_elem <= vmem_budget or hw % 128 != 0:
        return hw
    best = 128
    t = 128
    while t <= hw:
        if hw % t == 0 and 4 * C * t * per_elem <= vmem_budget:
            best = t
        t *= 2
    return best


# ----------------------------------------------------------------------------
# Wrapper
# ----------------------------------------------------------------------------
def gram_lin_forward(x, params, target_label, eps=1e-5, force_two_pass=False):
    B, C, H, W = x.shape
    assert B == 1, "GramLIN forward is only shape-consistent for batch size 1"
    HW = H * W
    x2 = x.reshape(C, HW)                   # native dtype (no wrapper upcast)
    in_isz = x2.dtype.itemsize
    gram_norm = float(B * C * H * W)

    # ---- tiny parameter prep (O(C^2), plain JAX) ----------------------------
    label = jnp.full((4,), 0.05, jnp.float32).at[target_label].set(1.0)
    # theta @ label = vec(gram) . (W1 @ label)
    w_eff = (params["weight_1"].astype(jnp.float32) @ label).reshape(C, C)
    g1 = params["gamma_1"].reshape(C, 1).astype(jnp.float32)
    g2 = params["gamma_2"].reshape(C, 1).astype(jnp.float32)
    b1 = params["beta_1"].reshape(C, 1).astype(jnp.float32)
    b2 = params["beta_2"].reshape(C, 1).astype(jnp.float32)
    rho = params["rho"].reshape(C, 1).astype(jnp.float32)
    pc = jnp.concatenate([g1, g2, b1, b2, rho,
                          jnp.zeros((C, 3), jnp.float32)], axis=1)   # (C, 8)

    vmem_cap = _vmem_capacity_bytes()
    f32_copy = 0 if x2.dtype == jnp.float32 else 4 * C * HW
    fused_bytes = C * HW * in_isz * 2 + f32_copy + 8 * C * C + (1 << 20)

    if (not force_two_pass) and fused_bytes <= vmem_cap // 2:
        # -------- fused single-kernel path (x read once, written once) -------
        vmem_limit = int(min(vmem_cap - (8 << 20),
                             max(32 << 20, 2 * fused_bytes + (8 << 20))))
        cost = pl.CostEstimate(
            flops=int(2 * C * C * HW + 8 * C * HW),
            transcendentals=int(C + 1),
            bytes_accessed=int(2 * C * HW * in_isz + 8 * C * C + 32 * C))
        out2 = pl.pallas_call(
            _make_fused_kernel(C, HW, eps, gram_norm),
            out_shape=jax.ShapeDtypeStruct((C, HW), x2.dtype),
            compiler_params=pltpu.CompilerParams(
                vmem_limit_bytes=vmem_limit),
            cost_estimate=cost,
        )(x2, w_eff, pc)
    else:
        # -------- two-pass fallback: tiled stats -> glue -> tiled apply ------
        tile_budget = max(vmem_cap // 4, 8 << 20)
        tile = _pick_tile(C, HW, in_isz, tile_budget)
        nt = HW // tile
        vmem_limit = int(min(vmem_cap - (8 << 20),
                             max(32 << 20,
                                 8 * C * tile * max(in_isz, 4) + (8 << 20))))

        stats_cost = pl.CostEstimate(
            flops=int(2 * C * C * HW + 2 * C * HW),
            transcendentals=0,
            bytes_accessed=int(C * HW * in_isz + 4 * C * C + 4 * C))
        gram_u, csum = pl.pallas_call(
            _stats_kernel,
            out_shape=(jax.ShapeDtypeStruct((C, C), jnp.float32),
                       jax.ShapeDtypeStruct((C, 1), jnp.float32)),
            grid=(nt,),
            in_specs=[pl.BlockSpec((C, tile), lambda t: (0, t))],
            out_specs=(pl.BlockSpec((C, C), lambda t: (0, 0)),
                       pl.BlockSpec((C, 1), lambda t: (0, 0))),
            compiler_params=pltpu.CompilerParams(
                dimension_semantics=("arbitrary",),
                vmem_limit_bytes=vmem_limit),
            cost_estimate=stats_cost,
        )(x2)

        nw = jnp.sum((gram_u / gram_norm) * w_eff)
        gamma = g1 * nw + g2
        beta = b1 * nw + b2
        sumsq = jnp.diagonal(gram_u)[:, None]                      # (C, 1)
        n = float(HW)
        nc = float(C * HW)
        in_mean = csum / n
        in_var = jnp.maximum((sumsq - n * in_mean * in_mean) / (n - 1.0), 0.0)
        inv_in = lax.rsqrt(in_var + eps)
        ln_mean = jnp.sum(csum) / nc
        ln_var = jnp.maximum(
            (jnp.sum(sumsq) - nc * ln_mean * ln_mean) / (nc - 1.0), 0.0)
        inv_ln = lax.rsqrt(ln_var + eps)
        a_vec = gamma * (rho * inv_in + (1.0 - rho) * inv_ln)
        b_vec = beta - gamma * (rho * in_mean * inv_in +
                                (1.0 - rho) * ln_mean * inv_ln)
        ab = jnp.concatenate([a_vec, b_vec], axis=1)               # (C, 2)

        apply_cost = pl.CostEstimate(
            flops=int(2 * C * HW), transcendentals=0,
            bytes_accessed=int(2 * C * HW * in_isz + 8 * C))
        out2 = pl.pallas_call(
            _apply_kernel,
            out_shape=jax.ShapeDtypeStruct((C, HW), x2.dtype),
            grid=(nt,),
            in_specs=[pl.BlockSpec((C, tile), lambda t: (0, t)),
                      pl.BlockSpec((C, 2), lambda t: (0, 0))],
            out_specs=pl.BlockSpec((C, tile), lambda t: (0, t)),
            compiler_params=pltpu.CompilerParams(
                dimension_semantics=("parallel",),
                vmem_limit_bytes=vmem_limit),
            cost_estimate=apply_cost,
        )(x2, ab)

    # Side-effect attributes (regularizers) — tiny 4x4 math, plain JAX glue.
    s_w = jax.nn.sigmoid(params["weight_1"].astype(jnp.float32))
    gramW = s_w.T @ s_w
    gramW2 = jnp.sqrt(1.0 / gramW)
    Dm = jnp.diag(jnp.diag(gramW2))
    gramA = (Dm @ gramW @ Dm) / 4.0
    aux = {
        "gramA_L1": jnp.sum(jnp.abs(gramA)) - jnp.trace(gramA),
        # NOTE: divides by log2(trace(gramA @ gramA)); /0 when trace == 1
        # (inherited from the reference implementation, not a kernel bug).
        "S_A": -1.0 / jnp.log2(jnp.trace(gramA @ gramA)),
    }
    return out2.reshape(B, C, H, W), aux


# ----------------------------------------------------------------------------
# Pure-JAX reference (mirrors the torch semantics, two-pass variances)
# ----------------------------------------------------------------------------
def gram_lin_reference(x, params, target_label, eps=1e-5):
    B, C, H, W = x.shape
    label = jnp.full((4,), 0.05, jnp.float32).at[target_label].set(1.0)
    f = x.reshape(C, H * W)
    gram = (f @ f.T) / (B * C * H * W)
    theta = gram.reshape(1, C * C) @ params["weight_1"]             # (1, 4)
    nw = (theta @ label[:, None])[0, 0]                             # scalar
    gamma = params["gamma_1"] * nw + params["gamma_2"]              # (1,C,1,1)
    beta = params["beta_1"] * nw + params["beta_2"]
    in_mean = jnp.mean(x, axis=(2, 3), keepdims=True)
    in_var = jnp.sum((x - in_mean) ** 2, axis=(2, 3), keepdims=True) / (
        H * W - 1)
    out_in = (x - in_mean) / jnp.sqrt(in_var + eps)
    ln_mean = jnp.mean(x, axis=(1, 2, 3), keepdims=True)
    ln_var = jnp.sum((x - ln_mean) ** 2, axis=(1, 2, 3), keepdims=True) / (
        C * H * W - 1)
    out_ln = (x - ln_mean) / jnp.sqrt(ln_var + eps)
    rho = params["rho"]
    out = rho * out_in + (1.0 - rho) * out_ln
    return out * gamma + beta


# ----------------------------------------------------------------------------
if __name__ == "__main__":
    B, C, H, W = 1, 8, 16, 16          # HW = 256
    target_label = 2
    eps = 1e-5

    key = jax.random.PRNGKey(0)
    k_x, k_w = jax.random.split(key)
    x = jax.random.normal(k_x, (B, C, H, W), dtype=jnp.float32)

    # Deterministic parameter init matching the module's __init__.
    params = {
        "weight_1": jax.random.normal(k_w, (C * C, 4), dtype=jnp.float32),
        "gamma_1": jnp.full((1, C, 1, 1), 1.0, jnp.float32),
        "gamma_2": jnp.full((1, C, 1, 1), 0.0, jnp.float32),
        "beta_1": jnp.full((1, C, 1, 1), 1.0, jnp.float32),
        "beta_2": jnp.full((1, C, 1, 1), 0.0, jnp.float32),
        "rho": jnp.full((1, C, 1, 1), 0.9, jnp.float32),
        "X": jnp.full((1, 4), 1.0, jnp.float32),   # unused in forward
    }

    ref = jax.block_until_ready(gram_lin_reference(x, params, target_label, eps))

    # Fused single-kernel path (default for VMEM-resident feature maps).
    out_fused, aux = gram_lin_forward(x, params, target_label, eps)
    out_fused = jax.block_until_ready(out_fused)
    np.testing.assert_allclose(np.asarray(out_fused), np.asarray(ref),
                               rtol=2e-3, atol=2e-3)

    # Two-pass fallback path (exercised explicitly so both paths stay valid).
    out_2p, _ = gram_lin_forward(x, params, target_label, eps,
                                 force_two_pass=True)
    out_2p = jax.block_until_ready(out_2p)
    np.testing.assert_allclose(np.asarray(out_2p), np.asarray(ref),
                               rtol=2e-3, atol=2e-3)

    print("KERNEL_OK")
</pallas_src>

<mosaic_0001>
module attributes {stable_mosaic.version = 11 : i64} {
  func.func @kernel(%arg0: memref<8x256xf32, #tpu.memory_space<vmem>>, %arg1: memref<8x8xf32, #tpu.memory_space<vmem>>, %arg2: memref<8x8xf32, #tpu.memory_space<vmem>>, %arg3: memref<8x256xf32, #tpu.memory_space<vmem>>) attributes {dimension_semantics = [], scalar_prefetch = 0 : i64, scratch_operands = 0 : i64, tpu.core_type = #tpu.core_type<tc>} {
    %c0 = arith.constant 0 : index
    %c0_0 = arith.constant 0 : index
    %0 = vector.load %arg0[%c0, %c0_0] : memref<8x256xf32, #tpu.memory_space<vmem>>, vector<8x256xf32>
    %cst = arith.constant dense<0.000000e+00> : vector<8x8xf32>
    %1 = tpu.matmul %0, %0, %cst {dimension_numbers = #tpu.dot_dimension_numbers<[1], [1], [0], [0], [0, 0, 1, 0], [], []>} : vector<8x256xf32>, vector<8x256xf32>, vector<8x8xf32> -> vector<8x8xf32>
    %cst_1 = arith.constant dense<0.000000e+00> : vector<8xf32>
    %2 = vector.multi_reduction <add>, %0, %cst_1 [1] : vector<8x256xf32> to vector<8xf32>
    %3 = vector.shape_cast %2 : vector<8xf32> to vector<8x1xf32>
    %4 = tpu.iota {dimensions = array<i32: 0>} : vector<8x8xi32>
    %5 = tpu.iota {dimensions = array<i32: 1>} : vector<8x8xi32>
    %6 = arith.cmpi eq, %4, %5 : vector<8x8xi32>
    %cst_2 = arith.constant 0.000000e+00 : f32
    %7 = vector.broadcast %cst_2 : f32 to vector<8x8xf32>
    %8 = arith.select %6, %1, %7 : vector<8x8xi1>, vector<8x8xf32>
    %cst_3 = arith.constant dense<0.000000e+00> : vector<8xf32>
    %9 = vector.multi_reduction <add>, %8, %cst_3 [1] : vector<8x8xf32> to vector<8xf32>
    %10 = vector.shape_cast %9 : vector<8xf32> to vector<8x1xf32>
    %c0_4 = arith.constant 0 : index
    %c0_5 = arith.constant 0 : index
    %11 = vector.load %arg1[%c0_4, %c0_5] : memref<8x8xf32, #tpu.memory_space<vmem>>, vector<8x8xf32>
    %12 = arith.mulf %1, %11 : vector<8x8xf32>
    %13 = vector.shape_cast %12 : vector<8x8xf32> to vector<1x8x8xf32>
    %cst_6 = arith.constant dense<0.000000e+00> : vector<1xf32>
    %14 = vector.multi_reduction <add>, %13, %cst_6 [1, 2] : vector<1x8x8xf32> to vector<1xf32>
    %15 = vector.shape_cast %14 : vector<1xf32> to vector<1x1x1xf32>
    %16 = vector.extract %15[0, 0, 0] : f32 from vector<1x1x1xf32>
    %17 = vector.broadcast %16 : f32 to vector<1x1xf32>
    %cst_7 = arith.constant 4.8828125E-4 : f32
    %18 = vector.broadcast %cst_7 : f32 to vector<1x1xf32>
    %19 = arith.mulf %17, %18 : vector<1x1xf32>
    %c0_8 = arith.constant 0 : index
    %c0_9 = arith.constant 0 : index
    %20 = vector.load %arg2[%c0_8, %c0_9] : memref<8x8xf32, #tpu.memory_space<vmem>>, vector<8x1xf32>
    %c0_10 = arith.constant 0 : index
    %c1 = arith.constant 1 : index
    %21 = vector.load %arg2[%c0_10, %c1] : memref<8x8xf32, #tpu.memory_space<vmem>>, vector<8x1xf32>
    %c0_11 = arith.constant 0 : index
    %c2 = arith.constant 2 : index
    %22 = vector.load %arg2[%c0_11, %c2] : memref<8x8xf32, #tpu.memory_space<vmem>>, vector<8x1xf32>
    %c0_12 = arith.constant 0 : index
    %c3 = arith.constant 3 : index
    %23 = vector.load %arg2[%c0_12, %c3] : memref<8x8xf32, #tpu.memory_space<vmem>>, vector<8x1xf32>
    %c0_13 = arith.constant 0 : index
    %c4 = arith.constant 4 : index
    %24 = vector.load %arg2[%c0_13, %c4] : memref<8x8xf32, #tpu.memory_space<vmem>>, vector<8x1xf32>
    %25 = vector.broadcast %19 : vector<1x1xf32> to vector<8x1xf32>
    %26 = arith.mulf %20, %25 : vector<8x1xf32>
    %27 = arith.addf %26, %21 : vector<8x1xf32>
    %28 = vector.broadcast %19 : vector<1x1xf32> to vector<8x1xf32>
    %29 = arith.mulf %22, %28 : vector<8x1xf32>
    %30 = arith.addf %29, %23 : vector<8x1xf32>
    %cst_14 = arith.constant 3.906250e-03 : f32
    %31 = vector.broadcast %cst_14 : f32 to vector<8x1xf32>
    %32 = arith.mulf %3, %31 : vector<8x1xf32>
    %cst_15 = arith.constant 2.560000e+02 : f32
    %33 = vector.broadcast %cst_15 : f32 to vector<8x1xf32>
    %34 = arith.mulf %33, %32 : vector<8x1xf32>
    %35 = arith.mulf %34, %32 : vector<8x1xf32>
    %36 = arith.subf %10, %35 : vector<8x1xf32>
    %cst_16 = arith.constant 2.550000e+02 : f32
    %37 = vector.broadcast %cst_16 : f32 to vector<8x1xf32>
    %38 = arith.divf %36, %37 : vector<8x1xf32>
    %cst_17 = arith.constant 0.000000e+00 : f32
    %39 = vector.broadcast %cst_17 : f32 to vector<8x1xf32>
    %40 = arith.maximumf %38, %39 : vector<8x1xf32>
    %cst_18 = arith.constant 9.99999974E-6 : f32
    %41 = vector.broadcast %cst_18 : f32 to vector<8x1xf32>
    %42 = arith.addf %40, %41 : vector<8x1xf32>
    %43 = math.rsqrt %42 : vector<8x1xf32>
    %44 = vector.shape_cast %3 : vector<8x1xf32> to vector<1x8x1xf32>
    %cst_19 = arith.constant dense<0.000000e+00> : vector<1xf32>
    %45 = vector.multi_reduction <add>, %44, %cst_19 [1, 2] : vector<1x8x1xf32> to vector<1xf32>
    %46 = vector.shape_cast %45 : vector<1xf32> to vector<1x1x1xf32>
    %47 = vector.extract %46[0, 0, 0] : f32 from vector<1x1x1xf32>
    %48 = vector.broadcast %47 : f32 to vector<1x1xf32>
    %cst_20 = arith.constant 4.8828125E-4 : f32
    %49 = vector.broadcast %cst_20 : f32 to vector<1x1xf32>
    %50 = arith.mulf %48, %49 : vector<1x1xf32>
    %51 = vector.shape_cast %10 : vector<8x1xf32> to vector<1x8x1xf32>
    %cst_21 = arith.constant dense<0.000000e+00> : vector<1xf32>
    %52 = vector.multi_reduction <add>, %51, %cst_21 [1, 2] : vector<1x8x1xf32> to vector<1xf32>
    %53 = vector.shape_cast %52 : vector<1xf32> to vector<1x1x1xf32>
    %54 = vector.extract %53[0, 0, 0] : f32 from vector<1x1x1xf32>
    %55 = vector.broadcast %54 : f32 to vector<1x1xf32>
    %cst_22 = arith.constant 2.048000e+03 : f32
    %56 = vector.broadcast %cst_22 : f32 to vector<1x1xf32>
    %57 = arith.mulf %56, %50 : vector<1x1xf32>
    %58 = arith.mulf %57, %50 : vector<1x1xf32>
    %59 = arith.subf %55, %58 : vector<1x1xf32>
    %cst_23 = arith.constant 2.047000e+03 : f32
    %60 = vector.broadcast %cst_23 : f32 to vector<1x1xf32>
    %61 = arith.divf %59, %60 : vector<1x1xf32>
    %cst_24 = arith.constant 0.000000e+00 : f32
    %62 = vector.broadcast %cst_24 : f32 to vector<1x1xf32>
    %63 = arith.maximumf %61, %62 : vector<1x1xf32>
    %cst_25 = arith.constant 9.99999974E-6 : f32
    %64 = vector.broadcast %cst_25 : f32 to vector<1x1xf32>
    %65 = arith.addf %63, %64 : vector<1x1xf32>
    %66 = math.rsqrt %65 : vector<1x1xf32>
    %67 = arith.mulf %24, %43 : vector<8x1xf32>
    %cst_26 = arith.constant 1.000000e+00 : f32
    %68 = vector.broadcast %cst_26 : f32 to vector<8x1xf32>
    %69 = arith.subf %68, %24 : vector<8x1xf32>
    %70 = vector.broadcast %66 : vector<1x1xf32> to vector<8x1xf32>
    %71 = arith.mulf %69, %70 : vector<8x1xf32>
    %72 = arith.addf %67, %71 : vector<8x1xf32>
    %73 = arith.mulf %27, %72 : vector<8x1xf32>
    %74 = arith.mulf %24, %32 : vector<8x1xf32>
    %75 = arith.mulf %74, %43 : vector<8x1xf32>
    %cst_27 = arith.constant 1.000000e+00 : f32
    %76 = vector.broadcast %cst_27 : f32 to vector<8x1xf32>
    %77 = arith.subf %76, %24 : vector<8x1xf32>
    %78 = vector.broadcast %50 : vector<1x1xf32> to vector<8x1xf32>
    %79 = arith.mulf %77, %78 : vector<8x1xf32>
    %80 = vector.broadcast %66 : vector<1x1xf32> to vector<8x1xf32>
    %81 = arith.mulf %79, %80 : vector<8x1xf32>
    %82 = arith.addf %75, %81 : vector<8x1xf32>
    %83 = arith.mulf %27, %82 : vector<8x1xf32>
    %84 = arith.subf %30, %83 : vector<8x1xf32>
    %85 = vector.broadcast %73 : vector<8x1xf32> to vector<8x256xf32>
    %86 = arith.mulf %0, %85 : vector<8x256xf32>
    %87 = vector.broadcast %84 : vector<8x1xf32> to vector<8x256xf32>
    %88 = arith.addf %86, %87 : vector<8x256xf32>
    %c0_28 = arith.constant 0 : index
    %c0_29 = arith.constant 0 : index
    %89 = vector.load %arg3[%c0_28, %c0_29] : memref<8x256xf32, #tpu.memory_space<vmem>>, vector<8x256xf32>
    tpu.vector_store %arg3[%c0_28, %c0_29], %88 {strides = array<i32>} : memref<8x256xf32, #tpu.memory_space<vmem>>, vector<8x256xf32>,
    return
  }
}

</mosaic_0001>

<llo_original>
// kernel: tpu_custom_call.1
$region0: #{tpu_custom_call.1}
  #allocation0 [shape = 'u32[]', space=smem, size = 0x4, offset = 0x4, fixed_abs, tag = 'smem constant byte address 0x4 - core index']
  #allocation1 [shape = 'u32[144,128]{1,0:T(1,128)}', space=vmem, size = 0x12000, scoped, tag = 'internal scratch']
  %s0 = inlined_call_operand.hbm [shape: f32[8,256], index: 0, kind: input, shape index: {}]
  %s1 = inlined_call_operand.hbm [shape: f32[8,8], index: 1, kind: input, shape index: {}]
  %s2 = inlined_call_operand.hbm [shape: f32[8,8], index: 2, kind: input, shape index: {}]
  %s3 = inlined_call_operand.hbm [shape: f32[8,256], index: 3, kind: output, shape index: {}]
  %s4 = sld [smem:[#allocation0]]
  $region34: #{tpu_custom_call.1} parent=0
    _
  %s6 = ssub.s32 1, %s4
  %s7 = scalar_select 0, %s6, %s4
  $region1: #{tpu_custom_call.1} parent=0
    #allocation2 [shape = 'u8[8192]{0}', space=vmem, size = 0x2000, scoped, tag = 'input window, operand 0, single buffered']
    #allocation3 [shape = 's32[1]{0}', space=sflag, size = 0x4, scoped, tag = 'scoped memory for tpu_custom_call.1']
    #allocation4 [shape = 's32[1]{0}', space=sflag, size = 0x4, scoped, tag = 'scoped memory for tpu_custom_call.1']
    #allocation5 [shape = 'u8[4096]{0}', space=vmem, size = 0x1000, scoped, tag = 'input window, operand 1, single buffered']
    #allocation6 [shape = 's32[1]{0}', space=sflag, size = 0x4, scoped, tag = 'scoped memory for tpu_custom_call.1']
    #allocation7 [shape = 'u8[4096]{0}', space=vmem, size = 0x1000, scoped, tag = 'input window, operand 2, single buffered']
    #allocation8 [shape = 'u8[8192]{0}', space=vmem, size = 0x2000, scoped, tag = 'output window, operand 0, single buffered']
    %8 = vsyncpa [#allocation3], 0
    %9 = vsyncpa [#allocation6], 0
    %10 = vsyncpa [#allocation4], 0
    // Predicated region
    $region2: #{tpu_custom_call.1} parent=1 // pred_check
      _
    $region3: #{tpu_custom_call.1} parent=1 // pred_check_branch
      %12 = sbr.rel (0) target = $region5
    $region4: #{tpu_custom_call.1} parent=1 // pred_region
      %s14 = ssub.s32 256, 256
      %15 = vsyncadd [#allocation3], %s14
      %s17 = sshll.u32 [#allocation2], 4
      %s18 = int_to_ptr.vmem [resolvable:$true] %s17
      %20 = dma.hbm_to_vmem [thread:$0]  %s0, 256, %s18, [#allocation3]
    $region5: #{tpu_custom_call.1} parent=1 // pred_fallthru
      _
    // Predicated region
    $region6: #{tpu_custom_call.1} parent=1 // pred_check
      _
    $region7: #{tpu_custom_call.1} parent=1 // pred_check_branch
      %22 = sbr.rel (0) target = $region9
    $region8: #{tpu_custom_call.1} parent=1 // pred_region
      %s24 = ssub.s32 128, 128
      %25 = vsyncadd [#allocation6], %s24
      %s27 = sshll.u32 [#allocation5], 4
      %s28 = int_to_ptr.vmem [resolvable:$true] %s27
      %30 = dma.hbm_to_vmem [thread:$0]  %s1, 128, %s28, [#allocation6]
    $region9: #{tpu_custom_call.1} parent=1 // pred_fallthru
      _
    // Predicated region
    $region10: #{tpu_custom_call.1} parent=1 // pred_check
      _
    $region11: #{tpu_custom_call.1} parent=1 // pred_check_branch
      %32 = sbr.rel (0) target = $region13
    $region12: #{tpu_custom_call.1} parent=1 // pred_region
      %s34 = ssub.s32 128, 128
      %35 = vsyncadd [#allocation6], %s34
      %s37 = sshll.u32 [#allocation7], 4
      %s38 = int_to_ptr.vmem [resolvable:$true] %s37
      %40 = dma.hbm_to_vmem [thread:$0]  %s2, 128, %s38, [#allocation6]
    $region13: #{tpu_custom_call.1} parent=1 // pred_fallthru
      _
    // Predicated region
    $region14: #{tpu_custom_call.1} parent=1 // pred_check
      _
    $region15: #{tpu_custom_call.1} parent=1 // pred_check_branch
      %42 = sbr.rel (0) target = $region17
    $region16: #{tpu_custom_call.1} parent=1 // pred_region
      %43 = dma.done [#allocation3], 256
    $region17: #{tpu_custom_call.1} parent=1 // pred_fallthru
      _
    // Predicated region
    $region18: #{tpu_custom_call.1} parent=1 // pred_check
      _
    $region19: #{tpu_custom_call.1} parent=1 // pred_check_branch
      %45 = sbr.rel (0) target = $region21
    $region20: #{tpu_custom_call.1} parent=1 // pred_region
      %46 = dma.done [#allocation6], 128
    $region21: #{tpu_custom_call.1} parent=1 // pred_fallthru
      _
    // Predicated region
    $region22: #{tpu_custom_call.1} parent=1 // pred_check
      _
    $region23: #{tpu_custom_call.1} parent=1 // pred_check_branch
      %48 = sbr.rel (0) target = $region25
    $region24: #{tpu_custom_call.1} parent=1 // pred_region
      %49 = dma.done [#allocation6], 128
    $region25: #{tpu_custom_call.1} parent=1 // pred_fallthru
      _
    %v50 = vld [vmem:[#allocation2] sm:$0xff]
    %v51 = vld [vmem:[#allocation2 + $0x8] sm:$0xff]
    %52 = vmatprep.subr.mxu0 0.0
    %53 = vmatpush1.xpose.msra.mxu0 0.0
    %54 = vmatprep.subr.mxu0 0.0
    %55 = vmatpush1.xpose.msra.mxu0 0.0
    %56 = vmatprep.subr.mxu0 0.0
    %57 = vmatpush1.xpose.msra.mxu0 0.0
    %58 = vmatprep.subr.mxu0 0.0
    %59 = vmatpush1.xpose.msra.mxu0 0.0
    %60 = vmatprep.subr.mxu0 0.0
    %61 = vmatpush1.xpose.msra.mxu0 0.0
    %62 = vmatprep.subr.mxu0 0.0
    %63 = vmatpush1.xpose.msra.mxu0 0.0
    %64 = vmatprep.subr.mxu0 0.0
    %65 = vmatpush1.xpose.msra.mxu0 0.0
    %66 = vmatprep.subr.mxu0 0.0
    %67 = vmatpush1.xpose.msra.mxu0 0.0
    %68 = vmatprep.subr.mxu0 0.0
    %69 = vmatpush1.xpose.msra.mxu0 0.0
    %70 = vmatprep.subr.mxu0 0.0
    %71 = vmatpush1.xpose.msra.mxu0 0.0
    %72 = vmatprep.subr.mxu0 0.0
    %73 = vmatpush1.xpose.msra.mxu0 0.0
    %74 = vmatprep.subr.mxu0 0.0
    %75 = vmatpush1.xpose.msra.mxu0 0.0
    %76 = vmatprep.subr.mxu0 0.0
    %77 = vmatpush1.xpose.msra.mxu0 0.0
    %78 = vmatprep.subr.mxu0 0.0
    %79 = vmatpush1.xpose.msra.mxu0 0.0
    %80 = vmatprep.subr.mxu0 0.0
    %81 = vmatpush1.xpose.msra.mxu0 0.0
    %82 = vmatprep.subr.mxu0 %v51
    %83 = vmatpush1.xpose.msra.mxu0 %v50
    %84 = vmatprep.subr.mxu0 0.0
    %85 = vmatpush2.xpose.msra.mxu0 0.0
    %86 = vmatprep.subr.mxu0 0.0
    %87 = vmatpush2.xpose.msra.mxu0 0.0
    %88 = vmatprep.subr.mxu0 0.0
    %89 = vmatpush2.xpose.msra.mxu0 0.0
    %90 = vmatprep.subr.mxu0 0.0
    %91 = vmatpush2.xpose.msra.mxu0 0.0
    %92 = vmatprep.subr.mxu0 0.0
    %93 = vmatpush2.xpose.msra.mxu0 0.0
    %94 = vmatprep.subr.mxu0 0.0
    %95 = vmatpush2.xpose.msra.mxu0 0.0
    %96 = vmatprep.subr.mxu0 0.0
    %97 = vmatpush2.xpose.msra.mxu0 0.0
    %98 = vmatprep.subr.mxu0 0.0
    %99 = vmatpush2.xpose.msra.mxu0 0.0
    %100 = vmatprep.subr.mxu0 0.0
    %101 = vmatpush2.xpose.msra.mxu0 0.0
    %102 = vmatprep.subr.mxu0 0.0
    %103 = vmatpush2.xpose.msra.mxu0 0.0
    %104 = vmatprep.subr.mxu0 0.0
    %105 = vmatpush2.xpose.msra.mxu0 0.0
    %106 = vmatprep.subr.mxu0 0.0
    %107 = vmatpush2.xpose.msra.mxu0 0.0
    %108 = vmatprep.subr.mxu0 0.0
    %109 = vmatpush2.xpose.msra.mxu0 0.0
    %110 = vmatprep.subr.mxu0 0.0
    %111 = vmatpush2.xpose.msra.mxu0 0.0
    %112 = vmatprep.subr.mxu0 0.0
    %113 = vmatpush2.xpose.msra.mxu0 0.0
    %114 = vmatprep.subr.mxu0 0.0
    %115 = vmatpush2.xpose.msra.mxu0 0.0
    %116 = vmatprep.mubr.f32.mxu0 %v51
    %117 = vmatmul.mubr.f32.gmra.mxu0 %v50
    %v118 = vpop.f32.mrf.mxu0
    %v119 = vadd.f32 0.0, %v118
    %v120 = vpop.f32.mrf.mxu0
    %121 = vdwg.mxu0
    %v122 = vadd.f32 %v50, %v51
    %123 = vadd.xlane.f32.xlu0 %v122
    %v124 = vpop.xlane.xlu0 %123
    %v125 = vlaneseq
    %v126 = vshrl.u32 %v125, 7
    %v127 = vlaneseq
    %v128 = vand.u32 %v127, 127
    %vm129 = vcmp.eq.s32.totalorder %v126, %v128
    %v130 = vsel %vm129, %v119, 0.0
    %vm131 = vcmask 64512
    %v132 = vsel %vm131, %v130, 0.0
    %133 = vadd.xlane.f32.xlu0 %v132
    %v134 = vpop.xlane.xlu0 %133
    %v135 = vld [vmem:[#allocation5] sm:$0xff]
    %v136 = vmul.f32 %v119, %v135
    %v137 = vsel %vm131, %v136, 0.0
    %138 = vadd.xlane.f32.xlu0 %v137
    %v139 = vpop.xlane.xlu0 %138
    %v140 = vrot.slane %v139, 4
    %v141 = vadd.f32 %v139, %v140
    %v142 = vrot.slane %v141, 2
    %v143 = vadd.f32 %v141, %v142
    %v144 = vrot.slane %v143, 1
    %v145 = vadd.f32 %v143, %v144
    %s146 = vtos %v145
    %v147 = vstv %s146
    %v148 = vmul.f32 %v147, 0.00048828125
    %v149 = vld [vmem:[#allocation7] sm:$0xff]
    %v150 = vmul.f32 %v149, %v148
    %152 = vrot.lane.b32.xlu0 %v149, 127
    %v153 = vpop.permute.xlu0 %152
    %v155 = vadd.f32 %v150, %v153
    %v156 = vmul.f32 %v124, 0.00390625
    %v157 = vmul.f32 %v156, 256.0
    %v158 = vmul.f32 %v157, %v156
    %v159 = vsub.f32 %v134, %v158
    %v160 = vrcp.pop 255.0
    %v161 = vmul.f32 %v159, %v160
    %v162 = vmax.f32 %v161, 0.0
    %v163 = vadd.f32 %v162, 1e-05
    %v164 = vrsqrt.pop %v163
    %vm165 = vcmask 7168
    %v166 = vsel %vm165, %v124, 0.0
    %167 = vadd.xlane.f32.xlu0 %v166
    %v168 = vpop.xlane.xlu0 %167
    %v169 = vrot.slane %v168, 4
    %v170 = vadd.f32 %v168, %v169
    %v171 = vrot.slane %v170, 2
    %v172 = vadd.f32 %v170, %v171
    %v173 = vrot.slane %v172, 1
    %v174 = vadd.f32 %v172, %v173
    %s175 = vtos %v174
    %v176 = vstv %s175
    %v177 = vmul.f32 %v176, 0.00048828125
    %v178 = vsel %vm165, %v134, 0.0
    %179 = vadd.xlane.f32.xlu0 %v178
    %v180 = vpop.xlane.xlu0 %179
    %v181 = vrot.slane %v180, 4
    %v182 = vadd.f32 %v180, %v181
    %v183 = vrot.slane %v182, 2
    %v184 = vadd.f32 %v182, %v183
    %v185 = vrot.slane %v184, 1
    %v186 = vadd.f32 %v184, %v185
    %s187 = vtos %v186
    %v188 = vstv %s187
    %v189 = vmul.f32 %v177, 2048.0
    %v190 = vmul.f32 %v189, %v177
    %v191 = vsub.f32 %v188, %v190
    %v192 = vrcp.pop 2047.0
    %v193 = vmul.f32 %v191, %v192
    %v194 = vmax.f32 %v193, 0.0
    %v195 = vadd.f32 %v194, 1e-05
    %v196 = vrsqrt.pop %v195
    %v197 = vmul.f32 %v149, %v164
    %v198 = vsub.f32 1.0, %v149
    %v199 = vmul.f32 %v198, %v196
    %v200 = vadd.f32 %v197, %v199
    %202 = vrot.lane.b32.xlu0 %v200, 124
    %v203 = vpop.permute.xlu0 %202
    %v205 = vmul.f32 %v155, %v203
    %v206 = vmul.f32 %v149, %v156
    %v207 = vmul.f32 %v206, %v164
    %v208 = vmul.f32 %v198, %v177
    %v209 = vmul.f32 %v208, %v196
    %v210 = vadd.f32 %v207, %v209
    %212 = vrot.lane.b32.xlu0 %v210, 124
    %v213 = vpop.permute.xlu0 %212
    %v215 = vmul.f32 %v155, %v213
    %217 = vrot.lane.b32.xlu0 %v215, 2
    %v218 = vpop.permute.xlu0 %217
    %v220 = vsub.f32 %v155, %v218
    %222 = vset.pattern.permute.xlu0 0
    %223 = vperm.xlu0 %222, %v205
    %v224 = vpop.permute.xlu0 %223
    %v226 = vmul.f32 %v50, %v224
    %v227 = vmul.f32 %v51, %v224
    %229 = vset.pattern.permute.xlu0 2
    %230 = vperm.xlu0 %229, %v220
    %v231 = vpop.permute.xlu0 %230
    %v233 = vadd.f32 %v226, %v231
    %v234 = vadd.f32 %v227, %v231
    %235 = vst [vmem:[#allocation8] sm:$0xff] %v233
    %236 = vst [vmem:[#allocation8 + $0x8] sm:$0xff] %v234
    // Predicated region
    $region26: #{tpu_custom_call.1} parent=1 // pred_check
      _
    $region27: #{tpu_custom_call.1} parent=1 // pred_check_branch
      %238 = sbr.rel (0) target = $region29
    $region28: #{tpu_custom_call.1} parent=1 // pred_region
      %s240 = ssub.s32 256, 256
      %241 = vsyncadd [#allocation4], %s240
      %s243 = sshll.u32 [#allocation8], 4
      %s244 = int_to_ptr.vmem [resolvable:$true] %s243
      %246 = dma.vmem_to_hbm [thread:$0]  %s244, 256, %s3, [#allocation4]
    $region29: #{tpu_custom_call.1} parent=1 // pred_fallthru
      _
    // Predicated region
    $region30: #{tpu_custom_call.1} parent=1 // pred_check
      _
    $region31: #{tpu_custom_call.1} parent=1 // pred_check_branch
      %248 = sbr.rel (0) target = $region33
    $region32: #{tpu_custom_call.1} parent=1 // pred_region
      %249 = dma.done [#allocation4], 256
    $region33: #{tpu_custom_call.1} parent=1 // pred_fallthru
      _
    %250 = vsyncpa [#allocation3], 1
    %251 = vsyncpa [#allocation6], 1
    %252 = vsyncpa [#allocation4], 1

</llo_original>
